<compile_context>
chip_gen: v7x
topology: tpu7x:2x2x1
jax: 0.10.0
libtpu: 0.0.40
codegen_flags: <defaults>
</compile_context>

<pallas_src>
import jax
import jax.numpy as jnp
from jax.experimental import pallas as pl
from jax.experimental.pallas import tpu as pltpu

_TILE = 512                 # batch rows per grid step (lane axis, mult. of 128)
_MIN_PALLAS_ROWS = _TILE    # below this, plain XLA is faster than a kernel launch


def _poly_kernel(w_ref, b_ref, x_ref, o_ref):
    # w_ref: (3,) f32 in SMEM, b_ref: (1,) f32 in SMEM.
    # x_ref: (3, TILE) f32 in VMEM (features on sublanes, batch on lanes).
    # o_ref: (1, TILE) f32 in VMEM (lane-dense output).
    x = x_ref[...]
    w0 = w_ref[0]
    w1 = w_ref[1]
    w2 = w_ref[2]
    b = b_ref[0]
    # 3 scalar*vector FMAs on the VPU + broadcast bias add; MXU untouched.
    o_ref[...] = (w0 * x[0:1, :] + w1 * x[1:2, :] + w2 * x[2:3, :] + b).astype(
        o_ref.dtype)


def poly_model_forward(x, weight, bias, *, tile=_TILE):
    """Forward pass of poly_model (out = x @ weight.T + bias).

    Args:
      x:      (N, 3)  float32
      weight: (1, 3)  float32  (PyTorch nn.Linear weight layout)
      bias:   (1,)    float32
    Returns:
      (N, 1) float32
    """
    n = x.shape[0]

    # Tiny batches: fixed pallas_call + DMA setup overhead dwarfs the work.
    if n < _MIN_PALLAS_ROWS:
        return x @ weight.T + bias.reshape(1, 1)

    n_pad = pl.cdiv(n, tile) * tile
    x_t = x.T                                      # (3, N) feature-major
    if n_pad != n:
        x_t = jnp.pad(x_t, ((0, 0), (0, n_pad - n)))   # pad lane axis w/ zeros

    w_vec = weight.reshape(3).astype(jnp.float32)  # (3,) for SMEM
    b_vec = bias.reshape(1).astype(jnp.float32)    # (1,) for SMEM

    out_t = pl.pallas_call(
        _poly_kernel,
        out_shape=jax.ShapeDtypeStruct((1, n_pad), jnp.float32),
        grid=(n_pad // tile,),
        in_specs=[
            pl.BlockSpec(memory_space=pltpu.MemorySpace.SMEM),   # weight (3,)
            pl.BlockSpec(memory_space=pltpu.MemorySpace.SMEM),   # bias   (1,)
            pl.BlockSpec((3, tile), lambda i: (0, i)),           # x tile
        ],
        out_specs=pl.BlockSpec((1, tile), lambda i: (0, i)),
        compiler_params=pltpu.CompilerParams(
            dimension_semantics=("parallel",)),
        cost_estimate=pl.CostEstimate(
            flops=6 * n, transcendentals=0, bytes_accessed=16 * n),
    )(w_vec, b_vec, x_t)

    return out_t[:, :n].reshape(n, 1)


if __name__ == "__main__":
    key = jax.random.PRNGKey(0)
    kx, kw, kb, kx2 = jax.random.split(key, 4)

    # Deterministic parameter init mimicking nn.Linear(3, 1):
    # uniform(-1/sqrt(in_features), 1/sqrt(in_features)).
    bound = 1.0 / jnp.sqrt(3.0)
    weight = jax.random.uniform(kw, (1, 3), jnp.float32, -bound, bound)
    bias = jax.random.uniform(kb, (1,), jnp.float32, -bound, bound)

    # 1) Pallas path: N not divisible by TILE exercises tiling + padding.
    N = 2000
    x = jax.random.normal(kx, (N, 3), dtype=jnp.float32)
    out = poly_model_forward(x, weight, bias)
    out = jax.block_until_ready(out)
    ref = x @ weight.T + bias
    assert out.shape == (N, 1)
    assert jnp.allclose(out, ref, atol=1e-5, rtol=1e-5)

    # 2) Tiny-batch path (dispatch to plain XLA, same semantics).
    n_small = 8
    x_small = jax.random.normal(kx2, (n_small, 3), dtype=jnp.float32)
    out_small = jax.block_until_ready(poly_model_forward(x_small, weight, bias))
    ref_small = x_small @ weight.T + bias
    assert out_small.shape == (n_small, 1)
    assert jnp.allclose(out_small, ref_small, atol=1e-5, rtol=1e-5)

    print("KERNEL_OK")
</pallas_src>

<mosaic_0001>
module attributes {stable_mosaic.version = 11 : i64} {
  func.func @_poly_kernel(%arg0: i32, %arg1: memref<3xf32, #tpu.memory_space<smem>>, %arg2: memref<1xf32, #tpu.memory_space<smem>>, %arg3: memref<3x512xf32, #tpu.memory_space<vmem>>, %arg4: memref<1x512xf32, #tpu.memory_space<vmem>>) attributes {dimension_semantics = [#tpu.dimension_semantics<parallel>], iteration_bounds = array<i64: 4>, scalar_prefetch = 0 : i64, scratch_operands = 0 : i64, tpu.core_type = #tpu.core_type<tc>, window_params = [{transform_indices = @transform_0, window_bounds = array<i64: 3>}, {transform_indices = @transform_1, window_bounds = array<i64: 1>}, {transform_indices = @transform_2, window_bounds = array<i64: 3, 512>}, {transform_indices = @transform_3, window_bounds = array<i64: 1, 512>}]} {
    %c0 = arith.constant 0 : index
    %c0_0 = arith.constant 0 : index
    %0 = vector.load %arg3[%c0, %c0_0] : memref<3x512xf32, #tpu.memory_space<vmem>>, vector<3x512xf32>
    %c0_1 = arith.constant 0 : index
    %1 = memref.load %arg1[%c0_1] : memref<3xf32, #tpu.memory_space<smem>>
    %c1 = arith.constant 1 : index
    %2 = memref.load %arg1[%c1] : memref<3xf32, #tpu.memory_space<smem>>
    %c2 = arith.constant 2 : index
    %3 = memref.load %arg1[%c2] : memref<3xf32, #tpu.memory_space<smem>>
    %c0_2 = arith.constant 0 : index
    %4 = memref.load %arg2[%c0_2] : memref<1xf32, #tpu.memory_space<smem>>
    %5 = vector.extract_strided_slice %0 {offsets = [0, 0], sizes = [1, 512], strides = [1, 1]} : vector<3x512xf32> to vector<1x512xf32>
    %6 = vector.broadcast %1 : f32 to vector<1x512xf32>
    %7 = arith.mulf %6, %5 : vector<1x512xf32>
    %8 = vector.extract_strided_slice %0 {offsets = [1, 0], sizes = [1, 512], strides = [1, 1]} : vector<3x512xf32> to vector<1x512xf32>
    %9 = vector.broadcast %2 : f32 to vector<1x512xf32>
    %10 = arith.mulf %9, %8 : vector<1x512xf32>
    %11 = arith.addf %7, %10 : vector<1x512xf32>
    %12 = vector.extract_strided_slice %0 {offsets = [2, 0], sizes = [1, 512], strides = [1, 1]} : vector<3x512xf32> to vector<1x512xf32>
    %13 = vector.broadcast %3 : f32 to vector<1x512xf32>
    %14 = arith.mulf %13, %12 : vector<1x512xf32>
    %15 = arith.addf %11, %14 : vector<1x512xf32>
    %16 = vector.broadcast %4 : f32 to vector<1x512xf32>
    %17 = arith.addf %15, %16 : vector<1x512xf32>
    %c0_3 = arith.constant 0 : index
    %c0_4 = arith.constant 0 : index
    %18 = vector.load %arg4[%c0_3, %c0_4] : memref<1x512xf32, #tpu.memory_space<vmem>>, vector<1x512xf32>
    tpu.vector_store %arg4[%c0_3, %c0_4], %17 {strides = array<i32>} : memref<1x512xf32, #tpu.memory_space<vmem>>, vector<1x512xf32>,
    return
  }
  func.func @transform_0(%arg0: i32) -> i32 {
    %c0_i32 = arith.constant 0 : i32
    %c0_i32_0 = arith.constant 0 : i32
    return %c0_i32 : i32
  }
  func.func @transform_1(%arg0: i32) -> i32 {
    %c0_i32 = arith.constant 0 : i32
    %c0_i32_0 = arith.constant 0 : i32
    return %c0_i32 : i32
  }
  func.func @transform_2(%arg0: i32) -> (i32, i32) {
    %c0_i32 = arith.constant 0 : i32
    %c0_i32_0 = arith.constant 0 : i32
    return %c0_i32, %arg0 : i32, i32
  }
  func.func @transform_3(%arg0: i32) -> (i32, i32) {
    %c0_i32 = arith.constant 0 : i32
    %c0_i32_0 = arith.constant 0 : i32
    return %c0_i32, %arg0 : i32, i32
  }
}

</mosaic_0001>

<llo_original>
// kernel: tpu_custom_call.1
$region0: #{tpu_custom_call.1}
  #allocation0 [shape = 'u32[]', space=smem, size = 0x4, offset = 0x4, fixed_abs, tag = 'smem constant byte address 0x4 - core index']
  #allocation1 [shape = 'u32[144,128]{1,0:T(1,128)}', space=vmem, size = 0x12000, scoped, tag = 'internal scratch']
  #allocation2 [shape = 'f32[1]{0:T(128)S(6)}', space=smem, size = 0x200, scoped, tag = 'scoped memory for tpu_custom_call.1']
  %s0 = inlined_call_operand.vmem [shape: f32[3], index: 0, kind: input, shape index: {}]
  %s1 = inlined_call_operand.<no memory space> [shape: f32[1], index: 1, kind: input, shape index: {}]
  %s2 = inlined_call_operand.hbm [shape: f32[3,2048], index: 2, kind: input, shape index: {}]
  %s3 = inlined_call_operand.hbm [shape: f32[1,2048], index: 3, kind: output, shape index: {}]
  %s4 = sld [smem:[#allocation0]]
  $region53: #{tpu_custom_call.1} parent=0
    _
  %s6 = ssub.s32 1, %s4
  %s7 = scalar_select 0, %s6, %s4
  %8 = sst [smem:[#allocation2]] %s1
  $region1: #{tpu_custom_call.1} parent=0
    #allocation3 [shape = 'u8[512]{0}', space=smem, size = 0x200, scoped, tag = 'input window, operand 0, single buffered']
    #allocation4 [shape = 's32[2]{0}', space=sflag, size = 0x8, scoped, tag = 'scoped memory for tpu_custom_call.1']
    #allocation5 [shape = 's32[2]{0}', space=sflag, size = 0x8, scoped, tag = 'scoped memory for tpu_custom_call.1']
    #allocation6 [shape = 's32[2]{0}', space=sflag, size = 0x8, scoped, tag = 'scoped memory for tpu_custom_call.1']
    #allocation7 [shape = 'u8[16384]{0}', space=vmem, size = 0x4000, scoped, tag = 'input window, operand 2']
    #allocation8 [shape = 'u8[4096]{0}', space=vmem, size = 0x1000, scoped, tag = 'output window, operand 0']
    %9 = vsyncpa [#allocation6], 0
    %10 = vsyncpa [#allocation4], 0
    %s11 = scalar_lea.sflag [#allocation4], 1
    %12 = vsyncpa %s11, 0
    %13 = vsyncpa [#allocation5], 0
    %s14 = scalar_lea.sflag [#allocation5], 1
    %15 = vsyncpa %s14, 0
    loop: start=0, step=1, limit=6
    $region2: #{tpu_custom_call.1} parent=1 // loop_pre_header
      _
    $region3: #{tpu_custom_call.1} parent=1 // loop_header
      %s17 = sphi 0, %s21
      %p18 = scmp.ge.s32.totalorder %s17, 6
      %s25 = sphi 0, %s25
      %s27 = sphi 0, %s25
      %s28 = sphi 0, %s27
      %s42 = sphi 0, %s28
      %s46 = sphi 0, %s46
      %s48 = sphi 0, %s46
      %s49 = sphi 0, %s48
      %s63 = sphi 0, %s49
      %s69 = sphi 0, %s71
      %s72 = sphi 0, %s69
      %s73 = sphi 0, %s72
      %s89 = sphi 0, %s73
      %s95 = sphi 0, %s97
      %s98 = sphi 0, %s95
      %s99 = sphi 0, %s98
      %s115 = sphi 0, %s99
    $region4: #{tpu_custom_call.1} parent=1 // loop_header_branch
      %20 = sbr.rel (%p18) target = $region8
    $region5: #{tpu_custom_call.1} parent=1 // loop_body
      %s22 = ssub.s32 %s17, 1
      %s23 = ssub.s32 %s17, 2
      %s24 = sadd.s32 %s17, 1
      %s26 = sadd.s32 %s25, 1
      %p29 = scmp.eq.s32.totalorder %s17, 3
      %p30 = scmp.ne.s32.totalorder %s25, %s27
      %p31 = scmp.eq.s32.totalorder %s17, 0
      %p32 = por %p30, %p31
      %p33 = scmp.ne.s32.totalorder %s25, %s27
      %p34 = scmp.eq.s32.totalorder %s22, 3
      %p35 = por %p33, %p34
      %p36 = scmp.ne.s32.totalorder %s27, %s28
      %p37 = scmp.eq.s32.totalorder %s22, 0
      %p38 = por %p36, %p37
      %p39 = scmp.ne.s32.totalorder %s27, %s28
      %p40 = scmp.eq.s32.totalorder %s23, 3
      %p41 = por %p39, %p40
      %p43 = scmp.ne.s32.totalorder %s28, %s42
      %p44 = scmp.eq.s32.totalorder %s23, 0
      %p45 = por %p43, %p44
      %s47 = sadd.s32 %s46, 1
      %p50 = scmp.eq.s32.totalorder %s17, 3
      %p51 = scmp.ne.s32.totalorder %s46, %s48
      %p52 = scmp.eq.s32.totalorder %s17, 0
      %p53 = por %p51, %p52
      %p54 = scmp.ne.s32.totalorder %s46, %s48
      %p55 = scmp.eq.s32.totalorder %s22, 3
      %p56 = por %p54, %p55
      %p57 = scmp.ne.s32.totalorder %s48, %s49
      %p58 = scmp.eq.s32.totalorder %s22, 0
      %p59 = por %p57, %p58
      %p60 = scmp.ne.s32.totalorder %s48, %s49
      %p61 = scmp.eq.s32.totalorder %s23, 3
      %p62 = por %p60, %p61
      %p64 = scmp.ne.s32.totalorder %s49, %s63
      %p65 = scmp.eq.s32.totalorder %s23, 0
      %p66 = por %p64, %p65
      %s67 = ssub.s32 %s17, %s24
      %p68 = scmp.eq.s32.totalorder %s67, 0
      %s70 = sadd.s32 %s69, 1
      %s71 = scalar_select %p68, %s69, %s70
      %p74 = pneg %p68
      %p75 = scmp.eq.s32.totalorder %s17, 3
      %p76 = por %p74, %p75
      %p77 = scmp.ne.s32.totalorder %s69, %s72
      %p78 = scmp.eq.s32.totalorder %s17, 0
      %p79 = por %p77, %p78
      %p80 = scmp.ne.s32.totalorder %s69, %s72
      %p81 = scmp.eq.s32.totalorder %s22, 3
      %p82 = por %p80, %p81
      %p83 = scmp.ne.s32.totalorder %s72, %s73
      %p84 = scmp.eq.s32.totalorder %s22, 0
      %p85 = por %p83, %p84
      %p86 = scmp.ne.s32.totalorder %s72, %s73
      %p87 = scmp.eq.s32.totalorder %s23, 3
      %p88 = por %p86, %p87
      %p90 = scmp.ne.s32.totalorder %s73, %s89
      %p91 = scmp.eq.s32.totalorder %s23, 0
      %p92 = por %p90, %p91
      %s93 = ssub.s32 %s17, %s24
      %p94 = scmp.eq.s32.totalorder %s93, 0
      %s96 = sadd.s32 %s95, 1
      %s97 = scalar_select %p94, %s95, %s96
      %p100 = pneg %p94
      %p101 = scmp.eq.s32.totalorder %s17, 3
      %p102 = por %p100, %p101
      %p103 = scmp.ne.s32.totalorder %s95, %s98
      %p104 = scmp.eq.s32.totalorder %s17, 0
      %p105 = por %p103, %p104
      %p106 = scmp.ne.s32.totalorder %s95, %s98
      %p107 = scmp.eq.s32.totalorder %s22, 3
      %p108 = por %p106, %p107
      %p109 = scmp.ne.s32.totalorder %s98, %s99
      %p110 = scmp.eq.s32.totalorder %s22, 0
      %p111 = por %p109, %p110
      %p112 = scmp.ne.s32.totalorder %s98, %s99
      %p113 = scmp.eq.s32.totalorder %s23, 3
      %p114 = por %p112, %p113
      %p116 = scmp.ne.s32.totalorder %s99, %s115
      %p117 = scmp.eq.s32.totalorder %s23, 0
      %p118 = por %p116, %p117
      %p119 = scmp.le.s32.totalorder 1, %s17
      %p120 = scmp.lt.s32.totalorder %s17, 5
      %p121 = pnand %p119, %p120
      %p122 = pneg %p121
      // Predicated region
      $region9: #{tpu_custom_call.1} parent=5 // pred_check
        _
      $region10: #{tpu_custom_call.1} parent=5 // pred_check_branch
        %124 = sbr.rel (%p121) target = $region12
      $region11: #{tpu_custom_call.1} parent=5 // pred_region
        %s125 = ssub.s32 %s17, 1
        // Predicated region
        $region13: #{tpu_custom_call.1} parent=11 // pred_check
          %p126 = pneg %p38
        $region14: #{tpu_custom_call.1} parent=11 // pred_check_branch
          %128 = sbr.rel (%p126) target = $region16
        $region15: #{tpu_custom_call.1} parent=11 // pred_region
          %s130 = ssub.s32 16, 16
          %131 = vsyncadd [#allocation6], %s130
          %s133 = sshll.u32 %s0, 4
          %s134 = int_to_ptr.vmem [resolvable:$true] %s133
          %136 = dma.vmem_to_smem %s134, 16, [#allocation3], [#allocation6]
        $region16: #{tpu_custom_call.1} parent=11 // pred_fallthru
          _
        // Predicated region
        $region17: #{tpu_custom_call.1} parent=11 // pred_check
          %p137 = pneg %p59
        $region18: #{tpu_custom_call.1} parent=11 // pred_check_branch
          %139 = sbr.rel (%p137) target = $region20
        $region19: #{tpu_custom_call.1} parent=11 // pred_region
          _
        $region20: #{tpu_custom_call.1} parent=11 // pred_fallthru
          _
      $region12: #{tpu_custom_call.1} parent=5 // pred_fallthru
        _
      %p140 = scmp.lt.s32.totalorder %s17, 4
      // Predicated region
      $region21: #{tpu_custom_call.1} parent=5 // pred_check
        %p141 = pneg %p140
      $region22: #{tpu_custom_call.1} parent=5 // pred_check_branch
        %143 = sbr.rel (%p141) target = $region24
      $region23: #{tpu_custom_call.1} parent=5 // pred_region
        // Predicated region
        $region25: #{tpu_custom_call.1} parent=23 // pred_check
          %p144 = pneg %p79
        $region26: #{tpu_custom_call.1} parent=23 // pred_check_branch
          %146 = sbr.rel (%p144) target = $region28
        $region27: #{tpu_custom_call.1} parent=23 // pred_region
          %s147 = sand.u32 %s69, 1
          %s148 = scalar_lea.sflag [#allocation4], %s147
          %s149 = sand.u32 %s69, 1
          %s150 = smul.addr %s149, 16
          %s151 = scalar_lea.vmem [#allocation7], %s150
          %s152 = smul.u32 4, %s17
          %s154 = ssub.s32 256, 256
          %155 = vsyncadd %s148, %s154
          %s156 = smul.addr %s152, 64
          %s157 = scalar_lea.hbm %s2, %s156
          %s159 = sshll.u32 %s151, 4
          %s160 = int_to_ptr.vmem [resolvable:$true] %s159
          %162 = dma.hbm_to_vmem [thread:$0]  %s157, 256, %s160, %s148
        $region28: #{tpu_custom_call.1} parent=23 // pred_fallthru
          _
      $region24: #{tpu_custom_call.1} parent=5 // pred_fallthru
        _
      %p163 = scmp.le.s32.totalorder 1, %s17
      %p164 = scmp.lt.s32.totalorder %s17, 5
      %p165 = pnand %p163, %p164
      %p166 = pneg %p165
      // Predicated region
      $region29: #{tpu_custom_call.1} parent=5 // pred_check
        _
      $region30: #{tpu_custom_call.1} parent=5 // pred_check_branch
        %168 = sbr.rel (%p165) target = $region32
      $region31: #{tpu_custom_call.1} parent=5 // pred_region
        %s169 = ssub.s32 %s17, 1
        // Predicated region
        $region33: #{tpu_custom_call.1} parent=31 // pred_check
          %p170 = pneg %p38
        $region34: #{tpu_custom_call.1} parent=31 // pred_check_branch
          %172 = sbr.rel (%p170) target = $region36
        $region35: #{tpu_custom_call.1} parent=31 // pred_region
          %173 = dma.done [#allocation6], 16
        $region36: #{tpu_custom_call.1} parent=31 // pred_fallthru
          _
        %s174 = sand.u32 %s72, 1
        %s175 = scalar_lea.sflag [#allocation4], %s174
        %s176 = sand.u32 %s72, 1
        %s177 = smul.addr %s176, 16
        %s178 = scalar_lea.vmem [#allocation7], %s177
        // Predicated region
        $region37: #{tpu_custom_call.1} parent=31 // pred_check
          %p179 = pneg %p85
        $region38: #{tpu_custom_call.1} parent=31 // pred_check_branch
          %181 = sbr.rel (%p179) target = $region40
        $region39: #{tpu_custom_call.1} parent=31 // pred_region
          %182 = dma.done %s175, 256
        $region40: #{tpu_custom_call.1} parent=31 // pred_fallthru
          _
        %183 = sfence
        %p184 = pneg %p38
        %p185 = pneg %p35
        %p186 = pneg %p59
        %p187 = pneg %p56
        %s188 = sand.u32 %s72, 1
        %s189 = scalar_lea.sflag [#allocation4], %s188
        %s190 = sand.u32 %s72, 1
        %s191 = smul.addr %s190, 16
        %s192 = scalar_lea.vmem [#allocation7], %s191
        %p193 = pneg %p85
        %p194 = pneg %p82
        %p195 = pneg %p111
        %p196 = pneg %p108
        %s197 = sand.u32 %s98, 1
        %s198 = scalar_lea.sflag [#allocation5], %s197
        %s199 = sand.u32 %s98, 1
        %s200 = smul.addr %s199, 4
        %s201 = scalar_lea.vmem [#allocation8], %s200
        %s202 = smul.u32 4, %s22
        %s203 = smul.u32 4, %s22
        %v204 = vld [vmem:[%s178] sm:$0x77]
        %v205 = vld [vmem:[%s178 + $0x8] sm:$0x77]
        %s206 = sld [smem:[#allocation3]]
        %s207 = sld [smem:[#allocation3 + $0x1]]
        %s208 = sld [smem:[#allocation3 + $0x2]]
        %s209 = sld [smem:[#allocation2]]
        %v210 = vstv %s206
        %v211 = vmul.f32 %v210, %v204
        %v212 = vmul.f32 %v210, %v205
        %v213 = vstv %s207
        %v214 = vmul.f32 %v213, %v204
        %v215 = vmul.f32 %v213, %v205
        %v218 = vrot.slane %v214, 5
        %v219 = vrot.slane %v218, 4
        %v220 = vrot.slane %v215, 5
        %v221 = vrot.slane %v220, 4
        %v224 = vadd.f32 %v211, %v219
        %v225 = vadd.f32 %v212, %v221
        %v226 = vstv %s208
        %v227 = vmul.f32 %v226, %v204
        %v228 = vmul.f32 %v226, %v205
        %v231 = vrot.slane %v227, 6
        %v232 = vrot.slane %v231, 4
        %v233 = vrot.slane %v228, 6
        %v234 = vrot.slane %v233, 4
        %v237 = vadd.f32 %v224, %v232
        %v238 = vadd.f32 %v225, %v234
        %v239 = vstv %s209
        %v240 = vadd.f32 %v237, %v239
        %v241 = vadd.f32 %v238, %v239
        %v245 = vunpack.c.l.s4 1966171168
        %v246 = vunpack.c.0.s8 %v245
        %v247 = vlaneseq
        %v248 = vshrl.u32 %v247, 7
        %v249 = vsub.s32 %v246, %v248
        %v250 = vrot.slane %v240, %v249
        %v252 = vunpack.c.l.s4 1966171168
        %v253 = vunpack.c.0.s8 %v252
        %v254 = vlaneseq
        %v255 = vshrl.u32 %v254, 7
        %v256 = vsub.s32 %v253, %v255
        %v257 = vrot.slane %v241, %v256
        %v258 = vcombine.low %v250, %v257
        %v260 = vunpack.c.l.s4 1966171168
        %v261 = vunpack.c.0.s8 %v260
        %v262 = vlaneseq
        %v263 = vshrl.u32 %v262, 7
        %v264 = vsub.s32 %v261, %v263
        %v265 = vrot.slane %v258, %v264
        %v267 = vlaneseq
        %vm268 = vcmp.ge.s32.totalorder %v267, 0
        %vm269 = vcmp.lt.s32.totalorder %v267, 512
        %vm270 = vmand %vm268, %vm269
        %271 = vst.msk [vmem:[%s201] sm:$0xf] %vm270, %v265
        %s272 = sand.u32 %s98, 1
        %s273 = scalar_lea.sflag [#allocation5], %s272
        %s274 = sand.u32 %s98, 1
        %s275 = smul.addr %s274, 4
        %s276 = scalar_lea.vmem [#allocation8], %s275
        // Predicated region
        $region41: #{tpu_custom_call.1} parent=31 // pred_check
          %p277 = pneg %p108
        $region42: #{tpu_custom_call.1} parent=31 // pred_check_branch
          %279 = sbr.rel (%p277) target = $region44
        $region43: #{tpu_custom_call.1} parent=31 // pred_region
          %s280 = smul.u32 4, %s22
          %s282 = ssub.s32 64, 64
          %283 = vsyncadd %s273, %s282
          %s284 = smul.addr %s280, 16
          %s285 = scalar_lea.hbm %s3, %s284
          %s287 = sshll.u32 %s276, 4
          %s288 = int_to_ptr.vmem [resolvable:$true] %s287
          %290 = dma.vmem_to_hbm [thread:$0]  %s288, 64, %s285, %s273
        $region44: #{tpu_custom_call.1} parent=31 // pred_fallthru
          _
      $region32: #{tpu_custom_call.1} parent=5 // pred_fallthru
        _
      %p291 = scmp.le.s32.totalorder 2, %s17
      // Predicated region
      $region45: #{tpu_custom_call.1} parent=5 // pred_check
        %p292 = pneg %p291
      $region46: #{tpu_custom_call.1} parent=5 // pred_check_branch
        %294 = sbr.rel (%p292) target = $region48
      $region47: #{tpu_custom_call.1} parent=5 // pred_region
        %s295 = ssub.s32 %s17, 2
        // Predicated region
        $region49: #{tpu_custom_call.1} parent=47 // pred_check
          %p296 = pneg %p114
        $region50: #{tpu_custom_call.1} parent=47 // pred_check_branch
          %298 = sbr.rel (%p296) target = $region52
        $region51: #{tpu_custom_call.1} parent=47 // pred_region
          %s299 = sand.u32 %s99, 1
          %s300 = scalar_lea.sflag [#allocation5], %s299
          %s301 = sand.u32 %s99, 1
          %s302 = smul.addr %s301, 4
          %s303 = scalar_lea.vmem [#allocation8], %s302
          %304 = dma.done %s300, 64
        $region52: #{tpu_custom_call.1} parent=47 // pred_fallthru
          _
      $region48: #{tpu_custom_call.1} parent=5 // pred_fallthru
        _
    $region6: #{tpu_custom_call.1} parent=1 // loop_footer
      %s21 = sadd.s32 1, %s17
    $region7: #{tpu_custom_call.1} parent=1 // loop_footer_branch
      %16 = sbr.rel target = $region3
    $region8: #{tpu_custom_call.1} parent=1 // loop_exit
      _
    %305 = vsyncpa [#allocation4], 1
    %s306 = scalar_lea.sflag [#allocation4], 1
    %307 = vsyncpa %s306, 1
    %308 = vsyncpa [#allocation5], 1
    %s309 = scalar_lea.sflag [#allocation5], 1
    %310 = vsyncpa %s309, 1
    %311 = vsyncpa [#allocation6], 1
    %s312 = scalar_lea.sflag [#allocation6], 1
    %313 = vsyncpa %s312, 1

</llo_original>
